<compile_context>
chip_gen: v6e
topology: v6e:2x2x1
jax: 0.10.0
libtpu: 0.0.40
codegen_flags: <defaults>
</compile_context>

<pallas_src>
import functools

import jax
import jax.numpy as jnp
from jax import lax
from jax.experimental import pallas as pl
from jax.experimental.pallas import tpu as pltpu


def _yolo_decode_kernel(scale_ref, grid_ref, p_ref, io_ref):
    # scale_ref: (na, no, 1)  f32  per-row multiplier: stride | anchor_w | anchor_h | 1
    # grid_ref:  (1, 2, Lt)   f32  xy cell offsets for this lane tile
    # p_ref:     (na, no, Lt)      raw predictions (native dtype)
    # io_ref:    (na, no, Lt)      decoded predictions (native dtype)
    na, no, lt = p_ref.shape

    x = p_ref[...].astype(jnp.float32)

    # Row-kind index along the `no` (sublane) axis.
    k = lax.broadcasted_iota(jnp.int32, (1, no, lt), 1)

    # Additive xy offsets on rows 0/1, zero elsewhere.
    off0 = grid_ref[:, 0:1, :]                                  # (1, 1, Lt)
    off1 = grid_ref[:, 1:2, :]                                  # (1, 1, Lt)
    add = jnp.where(k == 0, off0, jnp.where(k == 1, off1, jnp.float32(0.0)))

    # exp on the wh rows (2, 3); sigmoid (+ grid offset) everywhere else.
    is_wh = jnp.logical_and(k >= 2, k < 4)
    val = jnp.where(is_wh, jnp.exp(x), jax.nn.sigmoid(x) + add)

    # Per-row scale: stride (rows 0,1), raw anchors (rows 2,3), 1 (rows 4+).
    io_ref[...] = (val * scale_ref[...]).astype(io_ref.dtype)


@functools.partial(jax.jit, static_argnames=("stride", "lane_tile"))
def yolo_layer_forward(p, anchors, stride, lane_tile=512):
    """Mirrors YOLOLayer.forward in eval mode: returns (io, p_permuted)."""
    bs, c, ny, nx = p.shape
    na = anchors.shape[0]
    no = c // na
    L = ny * nx

    # Lane tile: full L when small (full-array-dim exemption to the 128 rule),
    # otherwise a 128-multiple tile; Pallas masks the ragged tail tile.
    Lt = L if L <= lane_tile else lane_tile
    nt = pl.cdiv(L, Lt)
    Lg = nt * Lt

    # xy cell offsets, replicating torch create_grids + the .view()
    # reinterpretation: for flattened l = y*nx + x the offsets are
    # (l % ny, l // ny).  Only this tiny (2, Lg) array is padded so the grid
    # input tiles exactly; the big prediction tensor is never padded.
    l_idx = jnp.arange(Lg, dtype=jnp.int32)
    grid2 = jnp.stack([(l_idx % ny).astype(jnp.float32),
                       (l_idx // ny).astype(jnp.float32)], axis=0)[None]    # (1, 2, Lg)

    # Per-row multiplier table: stride for xy, raw anchors for wh
    # (anchor_vec * stride == anchors), 1 for obj/class rows.
    scale = jnp.ones((na, no), jnp.float32)
    scale = scale.at[:, 0:2].set(float(stride))
    scale = scale.at[:, 2:4].set(anchors.astype(jnp.float32))
    scale = scale.reshape(na, no, 1)

    # (bs, na*no, ny, nx) -> (bs, na, no, L): pure reshape, no copy, no upcast,
    # no lane padding.
    p5 = p.reshape(bs, na, no, L)

    io_k = pl.pallas_call(
        _yolo_decode_kernel,
        out_shape=jax.ShapeDtypeStruct((bs, na, no, L), p.dtype),
        grid=(bs, nt),
        in_specs=[
            pl.BlockSpec((na, no, 1), lambda b, t: (0, 0, 0)),             # scale table
            pl.BlockSpec((1, 2, Lt), lambda b, t: (0, 0, t)),              # xy offsets
            pl.BlockSpec((None, na, no, Lt), lambda b, t: (b, 0, 0, t)),   # predictions
        ],
        out_specs=pl.BlockSpec((None, na, no, Lt), lambda b, t: (b, 0, 0, t)),
        compiler_params=pltpu.CompilerParams(
            dimension_semantics=("parallel", "parallel")),
    )(scale, grid2, p5)

    # Torch output contract.  Pure layout glue done by XLA (the torch module
    # itself pays the same permute+contiguous cost); p_perm / io transposes are
    # DCE'd if a caller only consumes the channel-major kernel output.
    p_perm = p5.reshape(bs, na, no, ny, nx).transpose(0, 1, 3, 4, 2)
    io = (io_k.reshape(bs, na, no, ny, nx)
               .transpose(0, 1, 3, 4, 2)
               .reshape(bs, -1, no))
    return io, p_perm


def _reference_forward(p, anchors, stride):
    """Pure-JAX, line-by-line mirror of the PyTorch forward (eval mode)."""
    p = p.astype(jnp.float32)
    bs, c, ny, nx = p.shape
    na = anchors.shape[0]
    no = c // na
    # torch.meshgrid([arange(nx), arange(ny)]) uses 'ij' indexing.
    gx, gy = jnp.meshgrid(jnp.arange(nx), jnp.arange(ny), indexing="ij")
    grid = jnp.stack((gy, gx), axis=2).reshape(1, 1, ny, nx, 2).astype(jnp.float32)
    anchor_wh = (anchors.astype(jnp.float32) / stride).reshape(1, na, 1, 1, 2)
    pp = p.reshape(bs, na, no, ny, nx).transpose(0, 1, 3, 4, 2)
    xy = (jax.nn.sigmoid(pp[..., :2]) + grid) * stride
    wh = jnp.exp(pp[..., 2:4]) * anchor_wh * stride
    rest = jax.nn.sigmoid(pp[..., 4:])
    io = jnp.concatenate([xy, wh, rest], axis=-1)
    return io.reshape(bs, -1, no), pp


if __name__ == "__main__":
    # Small deterministic setup consistent with the module:
    # anchors (na=3), nc=4 -> no = 9, input channels = na*no = 27.
    anchors = jnp.array([[10.0, 13.0], [16.0, 30.0], [33.0, 23.0]], jnp.float32)
    stride = 8
    nc = 4
    na, no = anchors.shape[0], nc + 5

    key = jax.random.PRNGKey(0)
    # square map / non-square map / map large enough to exercise the ragged lane tile
    for (bs, ny, nx) in [(2, 16, 16), (2, 12, 20), (1, 24, 28)]:
        key, sub = jax.random.split(key)
        x = jax.random.normal(sub, (bs, na * no, ny, nx), dtype=jnp.float32)

        io, p_perm = yolo_layer_forward(x, anchors, stride)
        io = jax.block_until_ready(io)
        p_perm = jax.block_until_ready(p_perm)

        io_ref, p_ref = _reference_forward(x, anchors, stride)
        assert io.shape == (bs, na * ny * nx, no), (io.shape, (bs, ny, nx))
        assert p_perm.shape == (bs, na, ny, nx, no)
        assert jnp.allclose(io, io_ref, atol=1e-5, rtol=1e-5), (bs, ny, nx)
        assert jnp.allclose(p_perm, p_ref, atol=1e-6, rtol=1e-6), (bs, ny, nx)

    print("KERNEL_OK")
</pallas_src>

<mosaic_0001>
module attributes {stable_mosaic.version = 11 : i64} {
  func.func @_yolo_decode_kernel(%arg0: i32, %arg1: i32, %arg2: memref<3x9x1xf32, #tpu.memory_space<vmem>>, %arg3: memref<1x2x256xf32, #tpu.memory_space<vmem>>, %arg4: memref<1x3x9x256xf32, #tpu.memory_space<vmem>>, %arg5: memref<1x3x9x256xf32, #tpu.memory_space<vmem>>) attributes {dimension_semantics = [#tpu.dimension_semantics<parallel>, #tpu.dimension_semantics<parallel>], iteration_bounds = array<i64: 2, 1>, scalar_prefetch = 0 : i64, scratch_operands = 0 : i64, tpu.core_type = #tpu.core_type<tc>, window_params = [{pipeline_mode = #tpu.pipeline_mode<synchronous>, transform_indices = @transform_0, window_bounds = array<i64: 3, 9, 1>}, {transform_indices = @transform_1, window_bounds = array<i64: 1, 2, 256>}, {transform_indices = @transform_2, window_bounds = array<i64: 1, 3, 9, 256>}, {transform_indices = @transform_3, window_bounds = array<i64: 1, 3, 9, 256>}]} {
    %c0 = arith.constant 0 : index
    %c0_0 = arith.constant 0 : index
    %c0_1 = arith.constant 0 : index
    %c0_2 = arith.constant 0 : index
    %0 = vector.load %arg4[%c0, %c0_0, %c0_1, %c0_2] : memref<1x3x9x256xf32, #tpu.memory_space<vmem>>, vector<1x3x9x256xf32>
    %1 = vector.shape_cast %0 : vector<1x3x9x256xf32> to vector<3x9x256xf32>
    %2 = tpu.iota {dimensions = array<i32: 1>} : vector<1x9x256xi32>
    %c0_3 = arith.constant 0 : index
    %c0_4 = arith.constant 0 : index
    %c0_5 = arith.constant 0 : index
    %3 = vector.load %arg3[%c0_3, %c0_4, %c0_5] : memref<1x2x256xf32, #tpu.memory_space<vmem>>, vector<1x1x256xf32>
    %c0_6 = arith.constant 0 : index
    %c1 = arith.constant 1 : index
    %c0_7 = arith.constant 0 : index
    %4 = vector.load %arg3[%c0_6, %c1, %c0_7] : memref<1x2x256xf32, #tpu.memory_space<vmem>>, vector<1x1x256xf32>
    %c0_i32 = arith.constant 0 : i32
    %5 = vector.broadcast %c0_i32 : i32 to vector<1x9x256xi32>
    %6 = arith.cmpi eq, %2, %5 : vector<1x9x256xi32>
    %c1_i32 = arith.constant 1 : i32
    %7 = vector.broadcast %c1_i32 : i32 to vector<1x9x256xi32>
    %8 = arith.cmpi eq, %2, %7 : vector<1x9x256xi32>
    %cst = arith.constant 0.000000e+00 : f32
    %9 = vector.shape_cast %4 : vector<1x1x256xf32> to vector<1x1x256xf32>
    %10 = vector.broadcast %9 : vector<1x1x256xf32> to vector<1x9x256xf32>
    %11 = vector.broadcast %cst : f32 to vector<1x9x256xf32>
    %12 = arith.select %8, %10, %11 : vector<1x9x256xi1>, vector<1x9x256xf32>
    %13 = vector.shape_cast %3 : vector<1x1x256xf32> to vector<1x1x256xf32>
    %14 = vector.broadcast %13 : vector<1x1x256xf32> to vector<1x9x256xf32>
    %15 = arith.select %6, %14, %12 : vector<1x9x256xi1>, vector<1x9x256xf32>
    %c2_i32 = arith.constant 2 : i32
    %16 = vector.broadcast %c2_i32 : i32 to vector<1x9x256xi32>
    %17 = arith.cmpi sge, %2, %16 : vector<1x9x256xi32>
    %c4_i32 = arith.constant 4 : i32
    %18 = vector.broadcast %c4_i32 : i32 to vector<1x9x256xi32>
    %19 = arith.cmpi slt, %2, %18 : vector<1x9x256xi32>
    %20 = arith.andi %17, %19 : vector<1x9x256xi1>
    %21 = math.exp %1 : vector<3x9x256xf32>
    %22 = arith.negf %1 : vector<3x9x256xf32>
    %23 = math.exp %22 : vector<3x9x256xf32>
    %cst_8 = arith.constant 1.000000e+00 : f32
    %24 = vector.broadcast %cst_8 : f32 to vector<3x9x256xf32>
    %25 = arith.addf %24, %23 : vector<3x9x256xf32>
    %26 = arith.divf %24, %25 : vector<3x9x256xf32>
    %27 = vector.broadcast %15 : vector<1x9x256xf32> to vector<3x9x256xf32>
    %28 = arith.addf %26, %27 : vector<3x9x256xf32>
    %29 = vector.shape_cast %20 : vector<1x9x256xi1> to vector<1x9x256xi1>
    %30 = vector.broadcast %29 : vector<1x9x256xi1> to vector<3x9x256xi1>
    %31 = arith.select %30, %21, %28 : vector<3x9x256xi1>, vector<3x9x256xf32>
    %c0_9 = arith.constant 0 : index
    %c0_10 = arith.constant 0 : index
    %c0_11 = arith.constant 0 : index
    %32 = vector.load %arg2[%c0_9, %c0_10, %c0_11] : memref<3x9x1xf32, #tpu.memory_space<vmem>>, vector<3x9x1xf32>
    %33 = vector.broadcast %32 : vector<3x9x1xf32> to vector<3x9x256xf32>
    %34 = arith.mulf %31, %33 : vector<3x9x256xf32>
    %c0_12 = arith.constant 0 : index
    %c0_13 = arith.constant 0 : index
    %c0_14 = arith.constant 0 : index
    %c0_15 = arith.constant 0 : index
    %35 = vector.load %arg5[%c0_12, %c0_13, %c0_14, %c0_15] : memref<1x3x9x256xf32, #tpu.memory_space<vmem>>, vector<1x3x9x256xf32>
    %36 = vector.shape_cast %35 : vector<1x3x9x256xf32> to vector<3x9x256xf32>
    %37 = vector.shape_cast %34 : vector<3x9x256xf32> to vector<1x3x9x256xf32>
    tpu.vector_store %arg5[%c0_12, %c0_13, %c0_14, %c0_15], %37 {strides = array<i32>} : memref<1x3x9x256xf32, #tpu.memory_space<vmem>>, vector<1x3x9x256xf32>,
    return
  }
  func.func @transform_0(%arg0: i32, %arg1: i32) -> (i32, i32, i32) {
    %c0_i32 = arith.constant 0 : i32
    %c0_i32_0 = arith.constant 0 : i32
    %c0_i32_1 = arith.constant 0 : i32
    %c0_i32_2 = arith.constant 0 : i32
    return %c0_i32, %c0_i32_0, %c0_i32_1 : i32, i32, i32
  }
  func.func @transform_1(%arg0: i32, %arg1: i32) -> (i32, i32, i32) {
    %c0_i32 = arith.constant 0 : i32
    %c0_i32_0 = arith.constant 0 : i32
    %c0_i32_1 = arith.constant 0 : i32
    return %c0_i32, %c0_i32_0, %arg1 : i32, i32, i32
  }
  func.func @transform_2(%arg0: i32, %arg1: i32) -> (i32, i32, i32, i32) {
    %c0_i32 = arith.constant 0 : i32
    %c0_i32_0 = arith.constant 0 : i32
    %c0_i32_1 = arith.constant 0 : i32
    return %arg0, %c0_i32, %c0_i32_0, %arg1 : i32, i32, i32, i32
  }
  func.func @transform_3(%arg0: i32, %arg1: i32) -> (i32, i32, i32, i32) {
    %c0_i32 = arith.constant 0 : i32
    %c0_i32_0 = arith.constant 0 : i32
    %c0_i32_1 = arith.constant 0 : i32
    return %arg0, %c0_i32, %c0_i32_0, %arg1 : i32, i32, i32, i32
  }
}

</mosaic_0001>

<llo_original>
// kernel: yolo_layer_forward.1
$region0: #{yolo_layer_forward.1}
  #allocation0 [shape = 'u32[]', space=smem, size = 0x4, offset = 0x4, fixed_abs, tag = 'smem constant byte address 0x4 - core index']
  #allocation1 [shape = 'u32[144,128]{1,0:T(1,128)}', space=vmem, size = 0x12000, scoped, tag = 'internal scratch']
  %s0 = inlined_call_operand.vmem [shape: f32[3,9,1], index: 0, kind: input, shape index: {}]
  %s1 = inlined_call_operand.vmem [shape: f32[1,2,256], index: 1, kind: input, shape index: {}]
  %s2 = inlined_call_operand.vmem [shape: f32[2,3,9,256], index: 2, kind: input, shape index: {}]
  %s3 = inlined_call_operand.vmem [shape: f32[2,3,9,256], index: 3, kind: output, shape index: {}]
  %s4 = sld [smem:[#allocation0]]
  $region45: #{yolo_layer_forward.1} parent=0
    _
  %s6 = ssub.s32 1, %s4
  %s7 = scalar_select 0, %s6, %s4
  loop: start=0, step=1, limit=4
  $region2: #{yolo_layer_forward.1} parent=0 // loop_pre_header
    _
  $region3: #{yolo_layer_forward.1} parent=0 // loop_header
    %s9 = sphi 0, %s13
    %p10 = scmp.ge.s32.totalorder %s9, 4
    %s16 = sphi 0, %s28
    %s17 = sphi 0, %s24
    %s18 = sphi 0, %s16
    %s19 = sphi 0, %s17
    %s20 = sphi 0, %s18
    %s21 = sphi 0, %s19
    %s29 = sphi 0, %s29
    %s31 = sphi 0, %s29
    %s32 = sphi 0, %s31
    %s46 = sphi 0, %s32
    %s52 = sphi 0, %s54
    %s55 = sphi 0, %s52
    %s56 = sphi 0, %s55
    %s72 = sphi 0, %s56
    %s80 = sphi 0, %s82
    %s83 = sphi 0, %s80
    %s84 = sphi 0, %s83
    %s100 = sphi 0, %s84
    %s108 = sphi 0, %s110
    %s111 = sphi 0, %s108
    %s112 = sphi 0, %s111
    %s128 = sphi 0, %s112
  $region4: #{yolo_layer_forward.1} parent=0 // loop_header_branch
    %12 = sbr.rel (%p10) target = $region8
  $region5: #{yolo_layer_forward.1} parent=0 // loop_body
    %s14 = ssub.s32 %s9, 1
    %s15 = ssub.s32 %s9, 2
    %s22 = sadd.s32 1, %s17
    %p23 = scmp.ge.s32.totalorder %s22, 1
    %s24 = scalar_select %p23, 0, %s22
    %s25 = sadd.s32 1, %s16
    %s26 = scalar_select %p23, %s25, %s16
    %p27 = scmp.ge.s32.totalorder %s26, 2
    %s28 = scalar_select %p27, 0, %s26
    %s30 = sadd.s32 %s29, 1
    %p33 = scmp.eq.s32.totalorder %s9, 1
    %p34 = scmp.ne.s32.totalorder %s29, %s31
    %p35 = scmp.eq.s32.totalorder %s9, 0
    %p36 = por %p34, %p35
    %p37 = scmp.ne.s32.totalorder %s29, %s31
    %p38 = scmp.eq.s32.totalorder %s14, 1
    %p39 = por %p37, %p38
    %p40 = scmp.ne.s32.totalorder %s31, %s32
    %p41 = scmp.eq.s32.totalorder %s14, 0
    %p42 = por %p40, %p41
    %p43 = scmp.ne.s32.totalorder %s31, %s32
    %p44 = scmp.eq.s32.totalorder %s15, 1
    %p45 = por %p43, %p44
    %p47 = scmp.ne.s32.totalorder %s32, %s46
    %p48 = scmp.eq.s32.totalorder %s15, 0
    %p49 = por %p47, %p48
    %s50 = ssub.s32 %s17, %s24
    %p51 = scmp.eq.s32.totalorder %s50, 0
    %s53 = sadd.s32 %s52, 1
    %s54 = scalar_select %p51, %s52, %s53
    %p57 = pneg %p51
    %p58 = scmp.eq.s32.totalorder %s9, 1
    %p59 = por %p57, %p58
    %p60 = scmp.ne.s32.totalorder %s52, %s55
    %p61 = scmp.eq.s32.totalorder %s9, 0
    %p62 = por %p60, %p61
    %p63 = scmp.ne.s32.totalorder %s52, %s55
    %p64 = scmp.eq.s32.totalorder %s14, 1
    %p65 = por %p63, %p64
    %p66 = scmp.ne.s32.totalorder %s55, %s56
    %p67 = scmp.eq.s32.totalorder %s14, 0
    %p68 = por %p66, %p67
    %p69 = scmp.ne.s32.totalorder %s55, %s56
    %p70 = scmp.eq.s32.totalorder %s15, 1
    %p71 = por %p69, %p70
    %p73 = scmp.ne.s32.totalorder %s56, %s72
    %p74 = scmp.eq.s32.totalorder %s15, 0
    %p75 = por %p73, %p74
    %s76 = ssub.s32 %s16, %s28
    %s77 = ssub.s32 %s17, %s24
    %s78 = sor.u32 %s76, %s77
    %p79 = scmp.eq.s32.totalorder %s78, 0
    %s81 = sadd.s32 %s80, 1
    %s82 = scalar_select %p79, %s80, %s81
    %p85 = pneg %p79
    %p86 = scmp.eq.s32.totalorder %s9, 1
    %p87 = por %p85, %p86
    %p88 = scmp.ne.s32.totalorder %s80, %s83
    %p89 = scmp.eq.s32.totalorder %s9, 0
    %p90 = por %p88, %p89
    %p91 = scmp.ne.s32.totalorder %s80, %s83
    %p92 = scmp.eq.s32.totalorder %s14, 1
    %p93 = por %p91, %p92
    %p94 = scmp.ne.s32.totalorder %s83, %s84
    %p95 = scmp.eq.s32.totalorder %s14, 0
    %p96 = por %p94, %p95
    %p97 = scmp.ne.s32.totalorder %s83, %s84
    %p98 = scmp.eq.s32.totalorder %s15, 1
    %p99 = por %p97, %p98
    %p101 = scmp.ne.s32.totalorder %s84, %s100
    %p102 = scmp.eq.s32.totalorder %s15, 0
    %p103 = por %p101, %p102
    %s104 = ssub.s32 %s16, %s28
    %s105 = ssub.s32 %s17, %s24
    %s106 = sor.u32 %s104, %s105
    %p107 = scmp.eq.s32.totalorder %s106, 0
    %s109 = sadd.s32 %s108, 1
    %s110 = scalar_select %p107, %s108, %s109
    %p113 = pneg %p107
    %p114 = scmp.eq.s32.totalorder %s9, 1
    %p115 = por %p113, %p114
    %p116 = scmp.ne.s32.totalorder %s108, %s111
    %p117 = scmp.eq.s32.totalorder %s9, 0
    %p118 = por %p116, %p117
    %p119 = scmp.ne.s32.totalorder %s108, %s111
    %p120 = scmp.eq.s32.totalorder %s14, 1
    %p121 = por %p119, %p120
    %p122 = scmp.ne.s32.totalorder %s111, %s112
    %p123 = scmp.eq.s32.totalorder %s14, 0
    %p124 = por %p122, %p123
    %p125 = scmp.ne.s32.totalorder %s111, %s112
    %p126 = scmp.eq.s32.totalorder %s15, 1
    %p127 = por %p125, %p126
    %p129 = scmp.ne.s32.totalorder %s112, %s128
    %p130 = scmp.eq.s32.totalorder %s15, 0
    %p131 = por %p129, %p130
    %p132 = scmp.le.s32.totalorder 1, %s9
    %p133 = scmp.lt.s32.totalorder %s9, 3
    %p134 = pnand %p132, %p133
    %p135 = pneg %p134
    // Predicated region
    $region9: #{yolo_layer_forward.1} parent=5 // pred_check
      _
    $region10: #{yolo_layer_forward.1} parent=5 // pred_check_branch
      %137 = sbr.rel (%p134) target = $region12
    $region11: #{yolo_layer_forward.1} parent=5 // pred_region
      %s138 = ssub.s32 %s9, 1
      // Predicated region
      $region13: #{yolo_layer_forward.1} parent=11 // pred_check
        %p139 = pneg %p42
      $region14: #{yolo_layer_forward.1} parent=11 // pred_check_branch
        %141 = sbr.rel (%p139) target = $region16
      $region15: #{yolo_layer_forward.1} parent=11 // pred_region
        _
      $region16: #{yolo_layer_forward.1} parent=11 // pred_fallthru
        _
      // Predicated region
      $region17: #{yolo_layer_forward.1} parent=11 // pred_check
        %p142 = pneg %p68
      $region18: #{yolo_layer_forward.1} parent=11 // pred_check_branch
        %144 = sbr.rel (%p142) target = $region20
      $region19: #{yolo_layer_forward.1} parent=11 // pred_region
        %s145 = smul.u32 2, %s19
        %p146 = scmp.lt.s32.totalorder %s145, 1
        %s147 = scalar_select %p146, %s145, 1
        %s148 = smul.addr %s147, 2
        %s149 = scalar_lea.vmem %s1, %s148
        %s150 = smul.u32 2, %s19
      $region20: #{yolo_layer_forward.1} parent=11 // pred_fallthru
        _
    $region12: #{yolo_layer_forward.1} parent=5 // pred_fallthru
      _
    %p151 = scmp.lt.s32.totalorder %s9, 2
    // Predicated region
    $region21: #{yolo_layer_forward.1} parent=5 // pred_check
      %p152 = pneg %p151
    $region22: #{yolo_layer_forward.1} parent=5 // pred_check_branch
      %154 = sbr.rel (%p152) target = $region24
    $region23: #{yolo_layer_forward.1} parent=5 // pred_region
      // Predicated region
      $region25: #{yolo_layer_forward.1} parent=23 // pred_check
        %p155 = pneg %p90
      $region26: #{yolo_layer_forward.1} parent=23 // pred_check_branch
        %157 = sbr.rel (%p155) target = $region28
      $region27: #{yolo_layer_forward.1} parent=23 // pred_region
        %s158 = smul.u32 2, %s17
        %p159 = scmp.lt.s32.totalorder %s16, 1
        %s160 = scalar_select %p159, %s16, 1
        %p161 = scmp.lt.s32.totalorder %s158, 1
        %s162 = scalar_select %p161, %s158, 1
        %s163 = smul.addr %s160, 12
        %s164 = sadd.s32 %s162, %s163
        %s165 = smul.addr %s164, 8
        %s166 = scalar_lea.vmem %s2, %s165
        %s167 = smul.u32 2, %s17
      $region28: #{yolo_layer_forward.1} parent=23 // pred_fallthru
        _
    $region24: #{yolo_layer_forward.1} parent=5 // pred_fallthru
      _
    %p168 = scmp.le.s32.totalorder 1, %s9
    %p169 = scmp.lt.s32.totalorder %s9, 3
    %p170 = pnand %p168, %p169
    %p171 = pneg %p170
    // Predicated region
    $region29: #{yolo_layer_forward.1} parent=5 // pred_check
      _
    $region30: #{yolo_layer_forward.1} parent=5 // pred_check_branch
      %173 = sbr.rel (%p170) target = $region32
    $region31: #{yolo_layer_forward.1} parent=5 // pred_region
      %s174 = ssub.s32 %s9, 1
      %p175 = pneg %p42
      %p176 = pneg %p39
      %s177 = smul.u32 2, %s19
      %p178 = scmp.lt.s32.totalorder %s177, 1
      %s179 = scalar_select %p178, %s177, 1
      %s180 = smul.addr %s179, 2
      %s181 = scalar_lea.vmem %s1, %s180
      %p182 = pneg %p68
      %p183 = pneg %p65
      %s184 = smul.u32 2, %s19
      %p185 = scmp.lt.s32.totalorder %s18, 1
      %s186 = scalar_select %p185, %s18, 1
      %p187 = scmp.lt.s32.totalorder %s184, 1
      %s188 = scalar_select %p187, %s184, 1
      %s189 = smul.addr %s186, 12
      %s190 = sadd.s32 %s188, %s189
      %s191 = smul.addr %s190, 8
      %s192 = scalar_lea.vmem %s2, %s191
      %p193 = pneg %p96
      %p194 = pneg %p93
      %p195 = pneg %p124
      %p196 = pneg %p121
      %s197 = smul.u32 2, %s19
      %p198 = scmp.lt.s32.totalorder %s18, 1
      %s199 = scalar_select %p198, %s18, 1
      %p200 = scmp.lt.s32.totalorder %s197, 1
      %s201 = scalar_select %p200, %s197, 1
      %s202 = smul.addr %s199, 12
      %s203 = sadd.s32 %s201, %s202
      %s204 = smul.addr %s203, 8
      %s205 = scalar_lea.vmem %s3, %s204
      %s206 = smul.u32 2, %s19
      %p207 = scmp.lt.s32.totalorder %s206, 1
      %s208 = scalar_select %p207, %s206, 1
      %s209 = smul.addr %s208, 2
      %s210 = scalar_lea.vmem %s1, %s209
      %s211 = smul.u32 2, %s19
      %s212 = smul.u32 2, %s19
      %p213 = scmp.lt.s32.totalorder %s18, 1
      %s214 = scalar_select %p213, %s18, 1
      %p215 = scmp.lt.s32.totalorder %s212, 1
      %s216 = scalar_select %p215, %s212, 1
      %s217 = smul.addr %s214, 12
      %s218 = sadd.s32 %s216, %s217
      %s219 = smul.addr %s218, 8
      %s220 = scalar_lea.vmem %s2, %s219
      %s221 = smul.u32 2, %s19
      %s222 = smul.u32 2, %s19
      %p223 = scmp.lt.s32.totalorder %s18, 1
      %s224 = scalar_select %p223, %s18, 1
      %p225 = scmp.lt.s32.totalorder %s222, 1
      %s226 = scalar_select %p225, %s222, 1
      %s227 = smul.addr %s224, 12
      %s228 = sadd.s32 %s226, %s227
      %s229 = smul.addr %s228, 8
      %s230 = scalar_lea.vmem %s3, %s229
      %s231 = smul.u32 2, %s19
      %v232 = vld [vmem:[%s220] sm:$0xff]
      %v233 = vld [vmem:[%s220 + $0x8] sm:$0xff]
      %v234 = vld [vmem:[%s220 + $0x10] sm:$0x1]
      %v235 = vld [vmem:[%s220 + $0x18] sm:$0x1]
      %v236 = vld [vmem:[%s220 + $0x20] sm:$0xff]
      %v237 = vld [vmem:[%s220 + $0x28] sm:$0xff]
      %v238 = vld [vmem:[%s220 + $0x30] sm:$0x1]
      %v239 = vld [vmem:[%s220 + $0x38] sm:$0x1]
      %v240 = vld [vmem:[%s220 + $0x40] sm:$0xff]
      %v241 = vld [vmem:[%s220 + $0x48] sm:$0xff]
      %v242 = vld [vmem:[%s220 + $0x50] sm:$0x1]
      %v243 = vld [vmem:[%s220 + $0x58] sm:$0x1]
      %v244 = vlaneseq
      %v245 = vshrl.u32 %v244, 7
      %v246 = vadd.s32 %v245, 8
      %v247 = vld [vmem:[%s210] ss:$2 sm:$0x3]
      %s248 = scalar_lea.vmem %s210, 1
      %v249 = vld [vmem:[%s248] ss:$2 sm:$0x3]
      %vm250 = vcmp.eq.s32.totalorder %v245, 0
      %vm251 = vcmp.eq.s32.totalorder %v246, 0
      %vm252 = vcmp.eq.s32.totalorder %v245, 1
      %vm253 = vcmp.eq.s32.totalorder %v246, 1
      %v255 = vlaneseq
      %v256 = vshrl.u32 %v255, 7
      %v257 = vsub.s32 0, %v256
      %v258 = vrot.slane %v249, %v257
      %v259 = vlaneseq
      %v260 = vshrl.u32 %v259, 7
      %v261 = vsub.s32 1, %v260
      %v262 = vrot.slane %v249, %v261
      %v265 = vsel %vm252, %v258, 0.0
      %v266 = vsel %vm252, %v262, 0.0
      %v267 = vsel %vm253, %v258, 0.0
      %v268 = vsel %vm253, %v262, 0.0
      %v270 = vlaneseq
      %v271 = vshrl.u32 %v270, 7
      %v272 = vsub.s32 0, %v271
      %v273 = vrot.slane %v247, %v272
      %v274 = vlaneseq
      %v275 = vshrl.u32 %v274, 7
      %v276 = vsub.s32 1, %v275
      %v277 = vrot.slane %v247, %v276
      %v280 = vsel %vm250, %v273, %v265
      %v281 = vsel %vm250, %v277, %v266
      %v282 = vsel %vm251, %v273, %v267
      %v283 = vsel %vm251, %v277, %v268
      %vm284 = vcmp.ge.s32.totalorder %v245, 2
      %vm285 = vcmp.ge.s32.totalorder %v246, 2
      %vm286 = vcmp.lt.s32.totalorder %v245, 4
      %vm287 = vcmp.lt.s32.totalorder %v246, 4
      %vm288 = vmand %vm284, %vm286
      %vm289 = vmand %vm285, %vm287
      %v290 = vmul.f32 %v232, 1.442695
      %v291 = vpow.pop %v290
      %v292 = vmul.f32 %v233, 1.442695
      %v293 = vpow.pop %v292
      %v294 = vmul.f32 %v234, 1.442695
      %v295 = vpow.pop %v294
      %v296 = vmul.f32 %v235, 1.442695
      %v297 = vpow.pop %v296
      %v298 = vmul.f32 %v236, 1.442695
      %v299 = vpow.pop %v298
      %v300 = vmul.f32 %v237, 1.442695
      %v301 = vpow.pop %v300
      %v302 = vmul.f32 %v238, 1.442695
      %v303 = vpow.pop %v302
      %v304 = vmul.f32 %v239, 1.442695
      %v305 = vpow.pop %v304
      %v306 = vmul.f32 %v240, 1.442695
      %v307 = vpow.pop %v306
      %v308 = vmul.f32 %v241, 1.442695
      %v309 = vpow.pop %v308
      %v310 = vmul.f32 %v242, 1.442695
      %v311 = vpow.pop %v310
      %v312 = vmul.f32 %v243, 1.442695
      %v313 = vpow.pop %v312
      %v314 = vxor.u32 %v232, 2147483648
      %v315 = vxor.u32 %v233, 2147483648
      %v316 = vxor.u32 %v234, 2147483648
      %v317 = vxor.u32 %v235, 2147483648
      %v318 = vxor.u32 %v236, 2147483648
      %v319 = vxor.u32 %v237, 2147483648
      %v320 = vxor.u32 %v238, 2147483648
      %v321 = vxor.u32 %v239, 2147483648
      %v322 = vxor.u32 %v240, 2147483648
      %v323 = vxor.u32 %v241, 2147483648
      %v324 = vxor.u32 %v242, 2147483648
      %v325 = vxor.u32 %v243, 2147483648
      %v326 = vmul.f32 %v314, 1.442695
      %v327 = vpow.pop %v326
      %v328 = vmul.f32 %v315, 1.442695
      %v329 = vpow.pop %v328
      %v330 = vmul.f32 %v316, 1.442695
      %v331 = vpow.pop %v330
      %v332 = vmul.f32 %v317, 1.442695
      %v333 = vpow.pop %v332
      %v334 = vmul.f32 %v318, 1.442695
      %v335 = vpow.pop %v334
      %v336 = vmul.f32 %v319, 1.442695
      %v337 = vpow.pop %v336
      %v338 = vmul.f32 %v320, 1.442695
      %v339 = vpow.pop %v338
      %v340 = vmul.f32 %v321, 1.442695
      %v341 = vpow.pop %v340
      %v342 = vmul.f32 %v322, 1.442695
      %v343 = vpow.pop %v342
      %v344 = vmul.f32 %v323, 1.442695
      %v345 = vpow.pop %v344
      %v346 = vmul.f32 %v324, 1.442695
      %v347 = vpow.pop %v346
      %v348 = vmul.f32 %v325, 1.442695
      %v349 = vpow.pop %v348
      %v350 = vadd.f32 %v327, 1.0
      %v351 = vadd.f32 %v329, 1.0
      %v352 = vadd.f32 %v331, 1.0
      %v353 = vadd.f32 %v333, 1.0
      %v354 = vadd.f32 %v335, 1.0
      %v355 = vadd.f32 %v337, 1.0
      %v356 = vadd.f32 %v339, 1.0
      %v357 = vadd.f32 %v341, 1.0
      %v358 = vadd.f32 %v343, 1.0
      %v359 = vadd.f32 %v345, 1.0
      %v360 = vadd.f32 %v347, 1.0
      %v361 = vadd.f32 %v349, 1.0
      %v362 = vrcp.pop %v350
      %v363 = vmul.f32 1.0, %v362
      %v364 = vrcp.pop %v351
      %v365 = vmul.f32 1.0, %v364
      %v366 = vrcp.pop %v352
      %v367 = vmul.f32 1.0, %v366
      %v368 = vrcp.pop %v353
      %v369 = vmul.f32 1.0, %v368
      %v370 = vrcp.pop %v354
      %v371 = vmul.f32 1.0, %v370
      %v372 = vrcp.pop %v355
      %v373 = vmul.f32 1.0, %v372
      %v374 = vrcp.pop %v356
      %v375 = vmul.f32 1.0, %v374
      %v376 = vrcp.pop %v357
      %v377 = vmul.f32 1.0, %v376
      %v378 = vrcp.pop %v358
      %v379 = vmul.f32 1.0, %v378
      %v380 = vrcp.pop %v359
      %v381 = vmul.f32 1.0, %v380
      %v382 = vrcp.pop %v360
      %v383 = vmul.f32 1.0, %v382
      %v384 = vrcp.pop %v361
      %v385 = vmul.f32 1.0, %v384
      %v386 = vadd.f32 %v363, %v280
      %v387 = vadd.f32 %v365, %v281
      %v388 = vadd.f32 %v367, %v282
      %v389 = vadd.f32 %v369, %v283
      %v390 = vadd.f32 %v371, %v280
      %v391 = vadd.f32 %v373, %v281
      %v392 = vadd.f32 %v375, %v282
      %v393 = vadd.f32 %v377, %v283
      %v394 = vadd.f32 %v379, %v280
      %v395 = vadd.f32 %v381, %v281
      %v396 = vadd.f32 %v383, %v282
      %v397 = vadd.f32 %v385, %v283
      %v398 = vsel %vm288, 1, 0
      %v399 = vsel %vm289, 1, 0
      %vm400 = vcmp.eq.s32.totalorder %v398, 1
      %vm401 = vcmp.eq.s32.totalorder %v399, 1
      %v402 = vsel %vm400, %v291, %v386
      %v403 = vsel %vm400, %v293, %v387
      %v404 = vsel %vm401, %v295, %v388
      %v405 = vsel %vm401, %v297, %v389
      %v406 = vsel %vm400, %v299, %v390
      %v407 = vsel %vm400, %v301, %v391
      %v408 = vsel %vm401, %v303, %v392
      %v409 = vsel %vm401, %v305, %v393
      %v410 = vsel %vm400, %v307, %v394
      %v411 = vsel %vm400, %v309, %v395
      %v412 = vsel %vm401, %v311, %v396
      %v413 = vsel %vm401, %v313, %v397
      %v414 = vld [vmem:[%s0] sm:$0xff]
      %v415 = vld [vmem:[%s0 + $0x8] sm:$0x1]
      %v416 = vld [vmem:[%s0 + $0x10] sm:$0xff]
      %v417 = vld [vmem:[%s0 + $0x18] sm:$0x1]
      %v418 = vld [vmem:[%s0 + $0x20] sm:$0xff]
      %v419 = vld [vmem:[%s0 + $0x28] sm:$0x1]
      %421 = vset.pattern.permute.xlu0 0
      %422 = vperm.xlu0 %421, %v414
      %v423 = vpop.permute.xlu0 %422
      %426 = vset.pattern.permute.xlu0 0
      %427 = vperm.xlu0 %426, %v415
      %v428 = vpop.permute.xlu0 %427
      %431 = vset.pattern.permute.xlu0 0
      %432 = vperm.xlu0 %431, %v416
      %v433 = vpop.permute.xlu0 %432
      %436 = vset.pattern.permute.xlu0 0
      %437 = vperm.xlu0 %436, %v417
      %v438 = vpop.permute.xlu0 %437
      %441 = vset.pattern.permute.xlu0 0
      %442 = vperm.xlu0 %441, %v418
      %v443 = vpop.permute.xlu0 %442
      %446 = vset.pattern.permute.xlu0 0
      %447 = vperm.xlu0 %446, %v419
      %v448 = vpop.permute.xlu0 %447
      %v450 = vmul.f32 %v402, %v423
      %v451 = vmul.f32 %v403, %v423
      %v452 = vmul.f32 %v404, %v428
      %v453 = vmul.f32 %v405, %v428
      %v454 = vmul.f32 %v406, %v433
      %v455 = vmul.f32 %v407, %v433
      %v456 = vmul.f32 %v408, %v438
      %v457 = vmul.f32 %v409, %v438
      %v458 = vmul.f32 %v410, %v443
      %v459 = vmul.f32 %v411, %v443
      %v460 = vmul.f32 %v412, %v448
      %v461 = vmul.f32 %v413, %v448
      %462 = vst [vmem:[%s230] sm:$0xff] %v450
      %463 = vst [vmem:[%s230 + $0x8] sm:$0xff] %v451
      %464 = vst [vmem:[%s230 + $0x10] sm:$0x1] %v452
      %465 = vst [vmem:[%s230 + $0x18] sm:$0x1] %v453
      %466 = vst [vmem:[%s230 + $0x20] sm:$0xff] %v454
      %467 = vst [vmem:[%s230 + $0x28] sm:$0xff] %v455
      %468 = vst [vmem:[%s230 + $0x30] sm:$0x1] %v456
      %469 = vst [vmem:[%s230 + $0x38] sm:$0x1] %v457
      %470 = vst [vmem:[%s230 + $0x40] sm:$0xff] %v458
      %471 = vst [vmem:[%s230 + $0x48] sm:$0xff] %v459
      %472 = vst [vmem:[%s230 + $0x50] sm:$0x1] %v460
      %473 = vst [vmem:[%s230 + $0x58] sm:$0x1] %v461
      %s474 = smul.u32 2, %s19
      %p475 = scmp.lt.s32.totalorder %s18, 1
      %s476 = scalar_select %p475, %s18, 1
      %p477 = scmp.lt.s32.totalorder %s474, 1
      %s478 = scalar_select %p477, %s474, 1
      %s479 = smul.addr %s476, 12
      %s480 = sadd.s32 %s478, %s479
      %s481 = smul.addr %s480, 8
      %s482 = scalar_lea.vmem %s3, %s481
      // Predicated region
      $region33: #{yolo_layer_forward.1} parent=31 // pred_check
        %p483 = pneg %p121
      $region34: #{yolo_layer_forward.1} parent=31 // pred_check_branch
        %485 = sbr.rel (%p483) target = $region36
      $region35: #{yolo_layer_forward.1} parent=31 // pred_region
        %s486 = smul.u32 2, %s19
      $region36: #{yolo_layer_forward.1} parent=31 // pred_fallthru
        _
    $region32: #{yolo_layer_forward.1} parent=5 // pred_fallthru
      _
    %p487 = scmp.le.s32.totalorder 2, %s9
    // Predicated region
    $region37: #{yolo_layer_forward.1} parent=5 // pred_check
      %p488 = pneg %p487
    $region38: #{yolo_layer_forward.1} parent=5 // pred_check_branch
      %490 = sbr.rel (%p488) target = $region40
    $region39: #{yolo_layer_forward.1} parent=5 // pred_region
      %s491 = ssub.s32 %s9, 2
      // Predicated region
      $region41: #{yolo_layer_forward.1} parent=39 // pred_check
        %p492 = pneg %p127
      $region42: #{yolo_layer_forward.1} parent=39 // pred_check_branch
        %494 = sbr.rel (%p492) target = $region44
      $region43: #{yolo_layer_forward.1} parent=39 // pred_region
        %s495 = smul.u32 2, %s21
        %p496 = scmp.lt.s32.totalorder %s20, 1
        %s497 = scalar_select %p496, %s20, 1
        %p498 = scmp.lt.s32.totalorder %s495, 1
        %s499 = scalar_select %p498, %s495, 1
        %s500 = smul.addr %s497, 12
        %s501 = sadd.s32 %s499, %s500
        %s502 = smul.addr %s501, 8
        %s503 = scalar_lea.vmem %s3, %s502
      $region44: #{yolo_layer_forward.1} parent=39 // pred_fallthru
        _
    $region40: #{yolo_layer_forward.1} parent=5 // pred_fallthru
      _
  $region6: #{yolo_layer_forward.1} parent=0 // loop_footer
    %s13 = sadd.s32 1, %s9
  $region7: #{yolo_layer_forward.1} parent=0 // loop_footer_branch
    %8 = sbr.rel target = $region3
  $region8: #{yolo_layer_forward.1} parent=0 // loop_exit
    _

</llo_original>
